<compile_context>
chip_gen: v7x
topology: tpu7x:2x2x1
jax: 0.10.0
libtpu: 0.0.40
codegen_flags: <defaults>
</compile_context>

<pallas_src>
import numpy as np
import jax
import jax.numpy as jnp
from jax.experimental import pallas as pl
from jax.experimental.pallas import tpu as pltpu

# Model hyper-parameters (small, consistent with the module's forward).
D_MODEL = 32
LATENT_DIM = 16
VOCAB = 64
BATCH = 8
SEQ = 8


def contrastive_kernel(scale_ref,   # SMEM (1,)            f32 : exp(temp), precomputed
                       tok_ref,     # VMEM [2, B, S]       i32 : packed x/y token ids
                       mask_ref,    # VMEM [2, B, S]       f32 : packed x/y masks
                       emb_ref,     # VMEM [2, VOCAB, D]   f32 : packed embX / embY tables
                       proj_ref,    # VMEM [2, D+1, LATENT]f32 : packed [W.T ; b] per branch
                       out_ref):    # VMEM [B, B]          f32 : logits
    vocab_iota = jax.lax.broadcasted_iota(jnp.int32, (BATCH, VOCAB), 1)

    def encode(slot):
        tok = tok_ref[slot]                      # [B, S] int32
        m = mask_ref[slot]                       # [B, S] f32
        # Masked one-hot histogram: counts[b, v] = sum_s m[b, s] * (tok[b, s] == v).
        # Unrolled over S (tiny) -> purely 2-D, lane-friendly VPU work.
        counts = jnp.zeros((BATCH, VOCAB), jnp.float32)
        for s in range(SEQ):
            hit = (tok[:, s:s + 1] == vocab_iota).astype(jnp.float32)
            counts = counts + hit * m[:, s:s + 1]
        # Masked mean pool == (counts @ emb) / sum(mask): embedding gather as an MXU matmul.
        emb = emb_ref[slot]                      # [VOCAB, D_MODEL]
        pooled = jnp.dot(counts, emb, preferred_element_type=jnp.float32)
        denom = jnp.maximum(jnp.sum(m, axis=1, keepdims=True), 1.0)
        pooled = pooled / denom
        # nn.Linear: pooled @ W.T + b  (W.T and bias packed together in proj_ref).
        blk = proj_ref[slot]                     # [D_MODEL + 1, LATENT_DIM]
        w = blk[:D_MODEL, :]
        b = blk[D_MODEL:D_MODEL + 1, :]
        p = jnp.dot(pooled, w, preferred_element_type=jnp.float32) + b
        # F.normalize(p=2, dim=1, eps=1e-12) == p * rsqrt(max(sum(p^2), eps^2))
        # (rsqrt runs on the EUP; avoids multi-pass VALU divides).
        eps = jnp.float32(1e-12)
        sumsq = jnp.sum(p * p, axis=-1, keepdims=True)
        return p * jax.lax.rsqrt(jnp.maximum(sumsq, eps * eps))

    x_n = encode(0)
    y_n = encode(1)
    # logits = x_n @ y_n.T * exp(temp); contraction expressed directly so no
    # explicit transpose is materialized before the MXU.
    logits = jax.lax.dot_general(
        x_n, y_n,
        dimension_numbers=(((1,), (1,)), ((), ())),
        preferred_element_type=jnp.float32)
    out_ref[...] = logits * scale_ref[0]


def contrastive_logits(scale, tokens, masks, emb, proj):
    b = tokens.shape[1]
    vmem = pl.BlockSpec(memory_space=pltpu.MemorySpace.VMEM)
    smem = pl.BlockSpec(memory_space=pltpu.MemorySpace.SMEM)
    return pl.pallas_call(
        contrastive_kernel,
        out_shape=jax.ShapeDtypeStruct((b, b), jnp.float32),
        in_specs=[smem, vmem, vmem, vmem, vmem],
        out_specs=vmem,
    )(scale, tokens, masks, emb, proj)


@jax.jit
def contrastive_forward(params, x_tokens, x_masks, y_tokens, y_masks):
    tokens = jnp.stack([x_tokens, y_tokens]).astype(jnp.int32)    # [2, B, S]
    masks = jnp.stack([x_masks, y_masks]).astype(jnp.float32)     # [2, B, S]
    scale = jnp.exp(params["temp"]).astype(jnp.float32)           # exp(temp) hoisted
    return contrastive_logits(scale, tokens, masks, params["emb"], params["proj"])


def init_params(key):
    ks = jax.random.split(key, 6)
    embX = jax.random.normal(ks[0], (VOCAB, D_MODEL), jnp.float32) * 0.02
    embY = jax.random.normal(ks[1], (VOCAB, D_MODEL), jnp.float32) * 0.02
    # nn.Linear(D_MODEL, LATENT_DIM): weight [LATENT, D_MODEL], bias [LATENT]
    wX = jax.random.normal(ks[2], (LATENT_DIM, D_MODEL), jnp.float32) / np.sqrt(D_MODEL)
    bX = jax.random.normal(ks[3], (LATENT_DIM,), jnp.float32) * 0.01
    wY = jax.random.normal(ks[4], (LATENT_DIM, D_MODEL), jnp.float32) / np.sqrt(D_MODEL)
    bY = jax.random.normal(ks[5], (LATENT_DIM,), jnp.float32) * 0.01
    temp = jnp.full((1,), np.log(1.0 / 0.07), jnp.float32)

    raw = {"embX": embX, "embY": embY, "wX": wX, "bX": bX, "wY": wY, "bY": bY,
           "temp": temp}
    packed = {
        "emb": jnp.stack([embX, embY]),                               # [2, VOCAB, D_MODEL]
        "proj": jnp.stack([
            jnp.concatenate([wX.T, bX.reshape(1, LATENT_DIM)], axis=0),
            jnp.concatenate([wY.T, bY.reshape(1, LATENT_DIM)], axis=0),
        ]),                                                           # [2, D_MODEL+1, LATENT]
        "temp": temp,
    }
    return packed, raw


def ref_text_encoder(tokens, masks, table):
    emb = table[tokens]                                   # [B, S, D_MODEL]
    m = masks[..., None]                                  # [B, S, 1]
    summed = jnp.sum(emb * m, axis=1)                     # [B, D_MODEL]
    denom = jnp.maximum(jnp.sum(m, axis=1), 1.0)          # [B, 1]
    return summed / denom


if __name__ == "__main__":
    root = jax.random.PRNGKey(0)
    kp, kd = jax.random.split(root)
    packed, raw = init_params(kp)

    k1, k2 = jax.random.split(kd)
    x_tokens = jax.random.randint(k1, (BATCH, SEQ), 0, VOCAB, dtype=jnp.int32)
    y_tokens = jax.random.randint(k2, (BATCH, SEQ), 0, VOCAB, dtype=jnp.int32)
    # Variable-length masks (>= 1 valid token per row) to exercise masked pooling.
    pos = jnp.arange(SEQ)[None, :]
    x_len = 1 + (jnp.arange(BATCH) % SEQ)
    y_len = SEQ - (jnp.arange(BATCH) % (SEQ - 1))
    x_masks = (pos < x_len[:, None]).astype(jnp.float32)
    y_masks = (pos < y_len[:, None]).astype(jnp.float32)

    logits = contrastive_forward(packed, x_tokens, x_masks, y_tokens, y_masks)
    logits = jax.block_until_ready(logits)

    # Reference (plain JAX, gather-based encoder — same math as the PyTorch module).
    xf = ref_text_encoder(x_tokens, x_masks, raw["embX"])
    yf = ref_text_encoder(y_tokens, y_masks, raw["embY"])
    px = xf @ raw["wX"].T + raw["bX"]
    py = yf @ raw["wY"].T + raw["bY"]
    px_n = px / jnp.maximum(jnp.linalg.norm(px, axis=1, keepdims=True), 1e-12)
    py_n = py / jnp.maximum(jnp.linalg.norm(py, axis=1, keepdims=True), 1e-12)
    ref = (px_n @ py_n.T) * jnp.exp(raw["temp"][0])

    # atol slightly looser than 1e-5: kernel uses rsqrt + matmul-based pooling,
    # the reference uses sqrt/divide + gather-sum (different rounding order).
    np.testing.assert_allclose(np.asarray(logits), np.asarray(ref),
                               rtol=1e-5, atol=1e-4)

    print("KERNEL_OK")
</pallas_src>

<mosaic_0001>
module attributes {stable_mosaic.version = 11 : i64} {
  func.func @contrastive_kernel(%arg0: memref<1xf32, #tpu.memory_space<smem>>, %arg1: memref<2x8x8xi32, #tpu.memory_space<vmem>>, %arg2: memref<2x8x8xf32, #tpu.memory_space<vmem>>, %arg3: memref<2x64x32xf32, #tpu.memory_space<vmem>>, %arg4: memref<2x33x16xf32, #tpu.memory_space<vmem>>, %arg5: memref<8x8xf32, #tpu.memory_space<vmem>>) attributes {dimension_semantics = [], scalar_prefetch = 0 : i64, scratch_operands = 0 : i64, tpu.core_type = #tpu.core_type<tc>} {
    %0 = tpu.iota {dimensions = array<i32: 1>} : vector<8x64xi32>
    %c0 = arith.constant 0 : index
    %c0_0 = arith.constant 0 : index
    %c0_1 = arith.constant 0 : index
    %1 = vector.load %arg1[%c0, %c0_0, %c0_1] : memref<2x8x8xi32, #tpu.memory_space<vmem>>, vector<1x8x8xi32>
    %2 = vector.shape_cast %1 : vector<1x8x8xi32> to vector<8x8xi32>
    %c0_2 = arith.constant 0 : index
    %c0_3 = arith.constant 0 : index
    %c0_4 = arith.constant 0 : index
    %3 = vector.load %arg2[%c0_2, %c0_3, %c0_4] : memref<2x8x8xf32, #tpu.memory_space<vmem>>, vector<1x8x8xf32>
    %4 = vector.shape_cast %3 : vector<1x8x8xf32> to vector<8x8xf32>
    %cst = arith.constant 0.000000e+00 : f32
    %5 = vector.broadcast %cst : f32 to vector<8x64xf32>
    %6 = vector.extract_strided_slice %2 {offsets = [0, 0], sizes = [8, 1], strides = [1, 1]} : vector<8x8xi32> to vector<8x1xi32>
    %7 = vector.broadcast %6 : vector<8x1xi32> to vector<8x64xi32>
    %8 = arith.cmpi eq, %7, %0 : vector<8x64xi32>
    %9 = arith.extui %8 : vector<8x64xi1> to vector<8x64xi32>
    %10 = arith.sitofp %9 : vector<8x64xi32> to vector<8x64xf32>
    %11 = vector.extract_strided_slice %4 {offsets = [0, 0], sizes = [8, 1], strides = [1, 1]} : vector<8x8xf32> to vector<8x1xf32>
    %12 = vector.broadcast %11 : vector<8x1xf32> to vector<8x64xf32>
    %13 = arith.mulf %10, %12 : vector<8x64xf32>
    %14 = arith.addf %5, %13 : vector<8x64xf32>
    %15 = vector.extract_strided_slice %2 {offsets = [0, 1], sizes = [8, 1], strides = [1, 1]} : vector<8x8xi32> to vector<8x1xi32>
    %16 = vector.broadcast %15 : vector<8x1xi32> to vector<8x64xi32>
    %17 = arith.cmpi eq, %16, %0 : vector<8x64xi32>
    %18 = arith.extui %17 : vector<8x64xi1> to vector<8x64xi32>
    %19 = arith.sitofp %18 : vector<8x64xi32> to vector<8x64xf32>
    %20 = vector.extract_strided_slice %4 {offsets = [0, 1], sizes = [8, 1], strides = [1, 1]} : vector<8x8xf32> to vector<8x1xf32>
    %21 = vector.broadcast %20 : vector<8x1xf32> to vector<8x64xf32>
    %22 = arith.mulf %19, %21 : vector<8x64xf32>
    %23 = arith.addf %14, %22 : vector<8x64xf32>
    %24 = vector.extract_strided_slice %2 {offsets = [0, 2], sizes = [8, 1], strides = [1, 1]} : vector<8x8xi32> to vector<8x1xi32>
    %25 = vector.broadcast %24 : vector<8x1xi32> to vector<8x64xi32>
    %26 = arith.cmpi eq, %25, %0 : vector<8x64xi32>
    %27 = arith.extui %26 : vector<8x64xi1> to vector<8x64xi32>
    %28 = arith.sitofp %27 : vector<8x64xi32> to vector<8x64xf32>
    %29 = vector.extract_strided_slice %4 {offsets = [0, 2], sizes = [8, 1], strides = [1, 1]} : vector<8x8xf32> to vector<8x1xf32>
    %30 = vector.broadcast %29 : vector<8x1xf32> to vector<8x64xf32>
    %31 = arith.mulf %28, %30 : vector<8x64xf32>
    %32 = arith.addf %23, %31 : vector<8x64xf32>
    %33 = vector.extract_strided_slice %2 {offsets = [0, 3], sizes = [8, 1], strides = [1, 1]} : vector<8x8xi32> to vector<8x1xi32>
    %34 = vector.broadcast %33 : vector<8x1xi32> to vector<8x64xi32>
    %35 = arith.cmpi eq, %34, %0 : vector<8x64xi32>
    %36 = arith.extui %35 : vector<8x64xi1> to vector<8x64xi32>
    %37 = arith.sitofp %36 : vector<8x64xi32> to vector<8x64xf32>
    %38 = vector.extract_strided_slice %4 {offsets = [0, 3], sizes = [8, 1], strides = [1, 1]} : vector<8x8xf32> to vector<8x1xf32>
    %39 = vector.broadcast %38 : vector<8x1xf32> to vector<8x64xf32>
    %40 = arith.mulf %37, %39 : vector<8x64xf32>
    %41 = arith.addf %32, %40 : vector<8x64xf32>
    %42 = vector.extract_strided_slice %2 {offsets = [0, 4], sizes = [8, 1], strides = [1, 1]} : vector<8x8xi32> to vector<8x1xi32>
    %43 = vector.broadcast %42 : vector<8x1xi32> to vector<8x64xi32>
    %44 = arith.cmpi eq, %43, %0 : vector<8x64xi32>
    %45 = arith.extui %44 : vector<8x64xi1> to vector<8x64xi32>
    %46 = arith.sitofp %45 : vector<8x64xi32> to vector<8x64xf32>
    %47 = vector.extract_strided_slice %4 {offsets = [0, 4], sizes = [8, 1], strides = [1, 1]} : vector<8x8xf32> to vector<8x1xf32>
    %48 = vector.broadcast %47 : vector<8x1xf32> to vector<8x64xf32>
    %49 = arith.mulf %46, %48 : vector<8x64xf32>
    %50 = arith.addf %41, %49 : vector<8x64xf32>
    %51 = vector.extract_strided_slice %2 {offsets = [0, 5], sizes = [8, 1], strides = [1, 1]} : vector<8x8xi32> to vector<8x1xi32>
    %52 = vector.broadcast %51 : vector<8x1xi32> to vector<8x64xi32>
    %53 = arith.cmpi eq, %52, %0 : vector<8x64xi32>
    %54 = arith.extui %53 : vector<8x64xi1> to vector<8x64xi32>
    %55 = arith.sitofp %54 : vector<8x64xi32> to vector<8x64xf32>
    %56 = vector.extract_strided_slice %4 {offsets = [0, 5], sizes = [8, 1], strides = [1, 1]} : vector<8x8xf32> to vector<8x1xf32>
    %57 = vector.broadcast %56 : vector<8x1xf32> to vector<8x64xf32>
    %58 = arith.mulf %55, %57 : vector<8x64xf32>
    %59 = arith.addf %50, %58 : vector<8x64xf32>
    %60 = vector.extract_strided_slice %2 {offsets = [0, 6], sizes = [8, 1], strides = [1, 1]} : vector<8x8xi32> to vector<8x1xi32>
    %61 = vector.broadcast %60 : vector<8x1xi32> to vector<8x64xi32>
    %62 = arith.cmpi eq, %61, %0 : vector<8x64xi32>
    %63 = arith.extui %62 : vector<8x64xi1> to vector<8x64xi32>
    %64 = arith.sitofp %63 : vector<8x64xi32> to vector<8x64xf32>
    %65 = vector.extract_strided_slice %4 {offsets = [0, 6], sizes = [8, 1], strides = [1, 1]} : vector<8x8xf32> to vector<8x1xf32>
    %66 = vector.broadcast %65 : vector<8x1xf32> to vector<8x64xf32>
    %67 = arith.mulf %64, %66 : vector<8x64xf32>
    %68 = arith.addf %59, %67 : vector<8x64xf32>
    %69 = vector.extract_strided_slice %2 {offsets = [0, 7], sizes = [8, 1], strides = [1, 1]} : vector<8x8xi32> to vector<8x1xi32>
    %70 = vector.broadcast %69 : vector<8x1xi32> to vector<8x64xi32>
    %71 = arith.cmpi eq, %70, %0 : vector<8x64xi32>
    %72 = arith.extui %71 : vector<8x64xi1> to vector<8x64xi32>
    %73 = arith.sitofp %72 : vector<8x64xi32> to vector<8x64xf32>
    %74 = vector.extract_strided_slice %4 {offsets = [0, 7], sizes = [8, 1], strides = [1, 1]} : vector<8x8xf32> to vector<8x1xf32>
    %75 = vector.broadcast %74 : vector<8x1xf32> to vector<8x64xf32>
    %76 = arith.mulf %73, %75 : vector<8x64xf32>
    %77 = arith.addf %68, %76 : vector<8x64xf32>
    %c0_5 = arith.constant 0 : index
    %c0_6 = arith.constant 0 : index
    %c0_7 = arith.constant 0 : index
    %78 = vector.load %arg3[%c0_5, %c0_6, %c0_7] : memref<2x64x32xf32, #tpu.memory_space<vmem>>, vector<1x64x32xf32>
    %79 = vector.shape_cast %78 : vector<1x64x32xf32> to vector<64x32xf32>
    %cst_8 = arith.constant dense<0.000000e+00> : vector<8x32xf32>
    %80 = tpu.matmul %77, %79, %cst_8 {dimension_numbers = #tpu.dot_dimension_numbers<[1], [0], [0], [1], [0, 0, 1, 1], [], []>} : vector<8x64xf32>, vector<64x32xf32>, vector<8x32xf32> -> vector<8x32xf32>
    %cst_9 = arith.constant dense<0.000000e+00> : vector<8xf32>
    %81 = vector.multi_reduction <add>, %4, %cst_9 [1] : vector<8x8xf32> to vector<8xf32>
    %82 = vector.shape_cast %81 : vector<8xf32> to vector<8x1xf32>
    %cst_10 = arith.constant 1.000000e+00 : f32
    %83 = vector.broadcast %cst_10 : f32 to vector<8x1xf32>
    %84 = arith.maximumf %82, %83 : vector<8x1xf32>
    %85 = vector.broadcast %84 : vector<8x1xf32> to vector<8x32xf32>
    %86 = arith.divf %80, %85 : vector<8x32xf32>
    %c0_11 = arith.constant 0 : index
    %c0_12 = arith.constant 0 : index
    %c0_13 = arith.constant 0 : index
    %87 = vector.load %arg4[%c0_11, %c0_12, %c0_13] : memref<2x33x16xf32, #tpu.memory_space<vmem>>, vector<1x33x16xf32>
    %88 = vector.shape_cast %87 : vector<1x33x16xf32> to vector<33x16xf32>
    %89 = vector.extract_strided_slice %88 {offsets = [0, 0], sizes = [32, 16], strides = [1, 1]} : vector<33x16xf32> to vector<32x16xf32>
    %90 = vector.extract_strided_slice %88 {offsets = [32, 0], sizes = [1, 16], strides = [1, 1]} : vector<33x16xf32> to vector<1x16xf32>
    %cst_14 = arith.constant dense<0.000000e+00> : vector<8x16xf32>
    %91 = tpu.matmul %86, %89, %cst_14 {dimension_numbers = #tpu.dot_dimension_numbers<[1], [0], [0], [1], [0, 0, 1, 1], [], []>} : vector<8x32xf32>, vector<32x16xf32>, vector<8x16xf32> -> vector<8x16xf32>
    %92 = vector.broadcast %90 : vector<1x16xf32> to vector<8x16xf32>
    %93 = arith.addf %91, %92 : vector<8x16xf32>
    %94 = arith.mulf %93, %93 : vector<8x16xf32>
    %cst_15 = arith.constant dense<0.000000e+00> : vector<8xf32>
    %95 = vector.multi_reduction <add>, %94, %cst_15 [1] : vector<8x16xf32> to vector<8xf32>
    %96 = vector.shape_cast %95 : vector<8xf32> to vector<8x1xf32>
    %cst_16 = arith.constant 9.99999996E-13 : f32
    %cst_17 = arith.constant 9.99999996E-13 : f32
    %97 = arith.mulf %cst_16, %cst_17 : f32
    %98 = vector.broadcast %97 : f32 to vector<8x1xf32>
    %99 = arith.maximumf %96, %98 : vector<8x1xf32>
    %100 = math.rsqrt %99 : vector<8x1xf32>
    %101 = vector.broadcast %100 : vector<8x1xf32> to vector<8x16xf32>
    %102 = arith.mulf %93, %101 : vector<8x16xf32>
    %c1 = arith.constant 1 : index
    %c0_18 = arith.constant 0 : index
    %c0_19 = arith.constant 0 : index
    %103 = vector.load %arg1[%c1, %c0_18, %c0_19] : memref<2x8x8xi32, #tpu.memory_space<vmem>>, vector<1x8x8xi32>
    %104 = vector.shape_cast %103 : vector<1x8x8xi32> to vector<8x8xi32>
    %c1_20 = arith.constant 1 : index
    %c0_21 = arith.constant 0 : index
    %c0_22 = arith.constant 0 : index
    %105 = vector.load %arg2[%c1_20, %c0_21, %c0_22] : memref<2x8x8xf32, #tpu.memory_space<vmem>>, vector<1x8x8xf32>
    %106 = vector.shape_cast %105 : vector<1x8x8xf32> to vector<8x8xf32>
    %cst_23 = arith.constant 0.000000e+00 : f32
    %107 = vector.broadcast %cst_23 : f32 to vector<8x64xf32>
    %108 = vector.extract_strided_slice %104 {offsets = [0, 0], sizes = [8, 1], strides = [1, 1]} : vector<8x8xi32> to vector<8x1xi32>
    %109 = vector.broadcast %108 : vector<8x1xi32> to vector<8x64xi32>
    %110 = arith.cmpi eq, %109, %0 : vector<8x64xi32>
    %111 = arith.extui %110 : vector<8x64xi1> to vector<8x64xi32>
    %112 = arith.sitofp %111 : vector<8x64xi32> to vector<8x64xf32>
    %113 = vector.extract_strided_slice %106 {offsets = [0, 0], sizes = [8, 1], strides = [1, 1]} : vector<8x8xf32> to vector<8x1xf32>
    %114 = vector.broadcast %113 : vector<8x1xf32> to vector<8x64xf32>
    %115 = arith.mulf %112, %114 : vector<8x64xf32>
    %116 = arith.addf %107, %115 : vector<8x64xf32>
    %117 = vector.extract_strided_slice %104 {offsets = [0, 1], sizes = [8, 1], strides = [1, 1]} : vector<8x8xi32> to vector<8x1xi32>
    %118 = vector.broadcast %117 : vector<8x1xi32> to vector<8x64xi32>
    %119 = arith.cmpi eq, %118, %0 : vector<8x64xi32>
    %120 = arith.extui %119 : vector<8x64xi1> to vector<8x64xi32>
    %121 = arith.sitofp %120 : vector<8x64xi32> to vector<8x64xf32>
    %122 = vector.extract_strided_slice %106 {offsets = [0, 1], sizes = [8, 1], strides = [1, 1]} : vector<8x8xf32> to vector<8x1xf32>
    %123 = vector.broadcast %122 : vector<8x1xf32> to vector<8x64xf32>
    %124 = arith.mulf %121, %123 : vector<8x64xf32>
    %125 = arith.addf %116, %124 : vector<8x64xf32>
    %126 = vector.extract_strided_slice %104 {offsets = [0, 2], sizes = [8, 1], strides = [1, 1]} : vector<8x8xi32> to vector<8x1xi32>
    %127 = vector.broadcast %126 : vector<8x1xi32> to vector<8x64xi32>
    %128 = arith.cmpi eq, %127, %0 : vector<8x64xi32>
    %129 = arith.extui %128 : vector<8x64xi1> to vector<8x64xi32>
    %130 = arith.sitofp %129 : vector<8x64xi32> to vector<8x64xf32>
    %131 = vector.extract_strided_slice %106 {offsets = [0, 2], sizes = [8, 1], strides = [1, 1]} : vector<8x8xf32> to vector<8x1xf32>
    %132 = vector.broadcast %131 : vector<8x1xf32> to vector<8x64xf32>
    %133 = arith.mulf %130, %132 : vector<8x64xf32>
    %134 = arith.addf %125, %133 : vector<8x64xf32>
    %135 = vector.extract_strided_slice %104 {offsets = [0, 3], sizes = [8, 1], strides = [1, 1]} : vector<8x8xi32> to vector<8x1xi32>
    %136 = vector.broadcast %135 : vector<8x1xi32> to vector<8x64xi32>
    %137 = arith.cmpi eq, %136, %0 : vector<8x64xi32>
    %138 = arith.extui %137 : vector<8x64xi1> to vector<8x64xi32>
    %139 = arith.sitofp %138 : vector<8x64xi32> to vector<8x64xf32>
    %140 = vector.extract_strided_slice %106 {offsets = [0, 3], sizes = [8, 1], strides = [1, 1]} : vector<8x8xf32> to vector<8x1xf32>
    %141 = vector.broadcast %140 : vector<8x1xf32> to vector<8x64xf32>
    %142 = arith.mulf %139, %141 : vector<8x64xf32>
    %143 = arith.addf %134, %142 : vector<8x64xf32>
    %144 = vector.extract_strided_slice %104 {offsets = [0, 4], sizes = [8, 1], strides = [1, 1]} : vector<8x8xi32> to vector<8x1xi32>
    %145 = vector.broadcast %144 : vector<8x1xi32> to vector<8x64xi32>
    %146 = arith.cmpi eq, %145, %0 : vector<8x64xi32>
    %147 = arith.extui %146 : vector<8x64xi1> to vector<8x64xi32>
    %148 = arith.sitofp %147 : vector<8x64xi32> to vector<8x64xf32>
    %149 = vector.extract_strided_slice %106 {offsets = [0, 4], sizes = [8, 1], strides = [1, 1]} : vector<8x8xf32> to vector<8x1xf32>
    %150 = vector.broadcast %149 : vector<8x1xf32> to vector<8x64xf32>
    %151 = arith.mulf %148, %150 : vector<8x64xf32>
    %152 = arith.addf %143, %151 : vector<8x64xf32>
    %153 = vector.extract_strided_slice %104 {offsets = [0, 5], sizes = [8, 1], strides = [1, 1]} : vector<8x8xi32> to vector<8x1xi32>
    %154 = vector.broadcast %153 : vector<8x1xi32> to vector<8x64xi32>
    %155 = arith.cmpi eq, %154, %0 : vector<8x64xi32>
    %156 = arith.extui %155 : vector<8x64xi1> to vector<8x64xi32>
    %157 = arith.sitofp %156 : vector<8x64xi32> to vector<8x64xf32>
    %158 = vector.extract_strided_slice %106 {offsets = [0, 5], sizes = [8, 1], strides = [1, 1]} : vector<8x8xf32> to vector<8x1xf32>
    %159 = vector.broadcast %158 : vector<8x1xf32> to vector<8x64xf32>
    %160 = arith.mulf %157, %159 : vector<8x64xf32>
    %161 = arith.addf %152, %160 : vector<8x64xf32>
    %162 = vector.extract_strided_slice %104 {offsets = [0, 6], sizes = [8, 1], strides = [1, 1]} : vector<8x8xi32> to vector<8x1xi32>
    %163 = vector.broadcast %162 : vector<8x1xi32> to vector<8x64xi32>
    %164 = arith.cmpi eq, %163, %0 : vector<8x64xi32>
    %165 = arith.extui %164 : vector<8x64xi1> to vector<8x64xi32>
    %166 = arith.sitofp %165 : vector<8x64xi32> to vector<8x64xf32>
    %167 = vector.extract_strided_slice %106 {offsets = [0, 6], sizes = [8, 1], strides = [1, 1]} : vector<8x8xf32> to vector<8x1xf32>
    %168 = vector.broadcast %167 : vector<8x1xf32> to vector<8x64xf32>
    %169 = arith.mulf %166, %168 : vector<8x64xf32>
    %170 = arith.addf %161, %169 : vector<8x64xf32>
    %171 = vector.extract_strided_slice %104 {offsets = [0, 7], sizes = [8, 1], strides = [1, 1]} : vector<8x8xi32> to vector<8x1xi32>
    %172 = vector.broadcast %171 : vector<8x1xi32> to vector<8x64xi32>
    %173 = arith.cmpi eq, %172, %0 : vector<8x64xi32>
    %174 = arith.extui %173 : vector<8x64xi1> to vector<8x64xi32>
    %175 = arith.sitofp %174 : vector<8x64xi32> to vector<8x64xf32>
    %176 = vector.extract_strided_slice %106 {offsets = [0, 7], sizes = [8, 1], strides = [1, 1]} : vector<8x8xf32> to vector<8x1xf32>
    %177 = vector.broadcast %176 : vector<8x1xf32> to vector<8x64xf32>
    %178 = arith.mulf %175, %177 : vector<8x64xf32>
    %179 = arith.addf %170, %178 : vector<8x64xf32>
    %c1_24 = arith.constant 1 : index
    %c0_25 = arith.constant 0 : index
    %c0_26 = arith.constant 0 : index
    %180 = vector.load %arg3[%c1_24, %c0_25, %c0_26] : memref<2x64x32xf32, #tpu.memory_space<vmem>>, vector<1x64x32xf32>
    %181 = vector.shape_cast %180 : vector<1x64x32xf32> to vector<64x32xf32>
    %cst_27 = arith.constant dense<0.000000e+00> : vector<8x32xf32>
    %182 = tpu.matmul %179, %181, %cst_27 {dimension_numbers = #tpu.dot_dimension_numbers<[1], [0], [0], [1], [0, 0, 1, 1], [], []>} : vector<8x64xf32>, vector<64x32xf32>, vector<8x32xf32> -> vector<8x32xf32>
    %cst_28 = arith.constant dense<0.000000e+00> : vector<8xf32>
    %183 = vector.multi_reduction <add>, %106, %cst_28 [1] : vector<8x8xf32> to vector<8xf32>
    %184 = vector.shape_cast %183 : vector<8xf32> to vector<8x1xf32>
    %cst_29 = arith.constant 1.000000e+00 : f32
    %185 = vector.broadcast %cst_29 : f32 to vector<8x1xf32>
    %186 = arith.maximumf %184, %185 : vector<8x1xf32>
    %187 = vector.broadcast %186 : vector<8x1xf32> to vector<8x32xf32>
    %188 = arith.divf %182, %187 : vector<8x32xf32>
    %c1_30 = arith.constant 1 : index
    %c0_31 = arith.constant 0 : index
    %c0_32 = arith.constant 0 : index
    %189 = vector.load %arg4[%c1_30, %c0_31, %c0_32] : memref<2x33x16xf32, #tpu.memory_space<vmem>>, vector<1x33x16xf32>
    %190 = vector.shape_cast %189 : vector<1x33x16xf32> to vector<33x16xf32>
    %191 = vector.extract_strided_slice %190 {offsets = [0, 0], sizes = [32, 16], strides = [1, 1]} : vector<33x16xf32> to vector<32x16xf32>
    %192 = vector.extract_strided_slice %190 {offsets = [32, 0], sizes = [1, 16], strides = [1, 1]} : vector<33x16xf32> to vector<1x16xf32>
    %cst_33 = arith.constant dense<0.000000e+00> : vector<8x16xf32>
    %193 = tpu.matmul %188, %191, %cst_33 {dimension_numbers = #tpu.dot_dimension_numbers<[1], [0], [0], [1], [0, 0, 1, 1], [], []>} : vector<8x32xf32>, vector<32x16xf32>, vector<8x16xf32> -> vector<8x16xf32>
    %194 = vector.broadcast %192 : vector<1x16xf32> to vector<8x16xf32>
    %195 = arith.addf %193, %194 : vector<8x16xf32>
    %196 = arith.mulf %195, %195 : vector<8x16xf32>
    %cst_34 = arith.constant dense<0.000000e+00> : vector<8xf32>
    %197 = vector.multi_reduction <add>, %196, %cst_34 [1] : vector<8x16xf32> to vector<8xf32>
    %198 = vector.shape_cast %197 : vector<8xf32> to vector<8x1xf32>
    %cst_35 = arith.constant 9.99999996E-13 : f32
    %cst_36 = arith.constant 9.99999996E-13 : f32
    %199 = arith.mulf %cst_35, %cst_36 : f32
    %200 = vector.broadcast %199 : f32 to vector<8x1xf32>
    %201 = arith.maximumf %198, %200 : vector<8x1xf32>
    %202 = math.rsqrt %201 : vector<8x1xf32>
    %203 = vector.broadcast %202 : vector<8x1xf32> to vector<8x16xf32>
    %204 = arith.mulf %195, %203 : vector<8x16xf32>
    %cst_37 = arith.constant dense<0.000000e+00> : vector<8x8xf32>
    %205 = tpu.matmul %102, %204, %cst_37 {dimension_numbers = #tpu.dot_dimension_numbers<[1], [1], [0], [0], [0, 0, 1, 0], [], []>} : vector<8x16xf32>, vector<8x16xf32>, vector<8x8xf32> -> vector<8x8xf32>
    %c0_38 = arith.constant 0 : index
    %206 = memref.load %arg0[%c0_38] : memref<1xf32, #tpu.memory_space<smem>>
    %207 = vector.broadcast %206 : f32 to vector<8x8xf32>
    %208 = arith.mulf %205, %207 : vector<8x8xf32>
    %c0_39 = arith.constant 0 : index
    %c0_40 = arith.constant 0 : index
    %209 = vector.load %arg5[%c0_39, %c0_40] : memref<8x8xf32, #tpu.memory_space<vmem>>, vector<8x8xf32>
    tpu.vector_store %arg5[%c0_39, %c0_40], %208 {strides = array<i32>} : memref<8x8xf32, #tpu.memory_space<vmem>>, vector<8x8xf32>,
    return
  }
}

</mosaic_0001>

<llo_original>
// kernel: contrastive_forward.1
$region0: #{contrastive_forward.1}
  #allocation0 [shape = 'u32[]', space=smem, size = 0x4, offset = 0x4, fixed_abs, tag = 'smem constant byte address 0x4 - core index']
  #allocation1 [shape = 'u32[144,128]{1,0:T(1,128)}', space=vmem, size = 0x12000, scoped, tag = 'internal scratch']
  #allocation2 [shape = 'f32[1]{0:T(128)S(6)}', space=smem, size = 0x200, scoped, tag = 'scoped memory for contrastive_forward.1']
  %s0 = inlined_call_operand.<no memory space> [shape: f32[1], index: 0, kind: input, shape index: {}]
  %s1 = inlined_call_operand.vmem [shape: s32[2,8,8], index: 1, kind: input, shape index: {}]
  %s2 = inlined_call_operand.vmem [shape: f32[2,8,8], index: 2, kind: input, shape index: {}]
  %s3 = inlined_call_operand.vmem [shape: f32[2,64,32], index: 3, kind: input, shape index: {}]
  %s4 = inlined_call_operand.vmem [shape: f32[2,33,16], index: 4, kind: input, shape index: {}]
  %s5 = inlined_call_operand.hbm [shape: f32[8,8], index: 5, kind: output, shape index: {}]
  %s6 = sld [smem:[#allocation0]]
  $region30: #{contrastive_forward.1} parent=0
    _
  %s8 = ssub.s32 1, %s6
  %s9 = scalar_select 0, %s8, %s6
  %10 = sst [smem:[#allocation2]] %s0
  $region1: #{contrastive_forward.1} parent=0
    #allocation3 [shape = 'u8[4096]{0}', space=vmem, size = 0x1000, scoped, tag = 'output window, operand 0, single buffered']
    #allocation4 [shape = 's32[1]{0}', space=sflag, size = 0x4, scoped, tag = 'scoped memory for contrastive_forward.1']
    %11 = vsyncpa [#allocation4], 0
    // Predicated region
    $region2: #{contrastive_forward.1} parent=1 // pred_check
      _
    $region3: #{contrastive_forward.1} parent=1 // pred_check_branch
      %13 = sbr.rel (0) target = $region5
    $region4: #{contrastive_forward.1} parent=1 // pred_region
      _
    $region5: #{contrastive_forward.1} parent=1 // pred_fallthru
      _
    // Predicated region
    $region6: #{contrastive_forward.1} parent=1 // pred_check
      _
    $region7: #{contrastive_forward.1} parent=1 // pred_check_branch
      %15 = sbr.rel (0) target = $region9
    $region8: #{contrastive_forward.1} parent=1 // pred_region
      _
    $region9: #{contrastive_forward.1} parent=1 // pred_fallthru
      _
    // Predicated region
    $region10: #{contrastive_forward.1} parent=1 // pred_check
      _
    $region11: #{contrastive_forward.1} parent=1 // pred_check_branch
      %17 = sbr.rel (0) target = $region13
    $region12: #{contrastive_forward.1} parent=1 // pred_region
      _
    $region13: #{contrastive_forward.1} parent=1 // pred_fallthru
      _
    // Predicated region
    $region14: #{contrastive_forward.1} parent=1 // pred_check
      _
    $region15: #{contrastive_forward.1} parent=1 // pred_check_branch
      %19 = sbr.rel (0) target = $region17
    $region16: #{contrastive_forward.1} parent=1 // pred_region
      _
    $region17: #{contrastive_forward.1} parent=1 // pred_fallthru
      _
    // Predicated region
    $region18: #{contrastive_forward.1} parent=1 // pred_check
      _
    $region19: #{contrastive_forward.1} parent=1 // pred_check_branch
      %21 = sbr.rel (0) target = $region21
    $region20: #{contrastive_forward.1} parent=1 // pred_region
      _
    $region21: #{contrastive_forward.1} parent=1 // pred_fallthru
      _
    %v22 = vlaneseq
    %v23 = vand.u32 %v22, 127
    %v24 = vld [vmem:[%s1] sm:$0xff]
    %v25 = vld [vmem:[%s2] sm:$0xff]
    %26 = vset.pattern.permute.xlu0 0
    %27 = vperm.xlu0 %26, %v24
    %v28 = vpop.permute.xlu0 %27
    %vm29 = vcmp.eq.s32.totalorder %v28, %v23
    %v30 = vsel %vm29, 1, 0
    %v31 = vcvt.s32.f32 %v30
    %33 = vset.pattern.permute.xlu0 0
    %34 = vperm.xlu0 %33, %v25
    %v35 = vpop.permute.xlu0 %34
    %v37 = vmul.f32 %v31, %v35
    %v38 = vadd.f32 %v37, 0.0
    %39 = vset.pattern.permute.xlu0 1
    %40 = vperm.xlu0 %39, %v24
    %v41 = vpop.permute.xlu0 %40
    %vm42 = vcmp.eq.s32.totalorder %v41, %v23
    %v43 = vsel %vm42, 1, 0
    %v44 = vcvt.s32.f32 %v43
    %45 = vset.pattern.permute.xlu0 1
    %46 = vperm.xlu0 %45, %v25
    %v47 = vpop.permute.xlu0 %46
    %v49 = vmul.f32 %v44, %v47
    %v50 = vadd.f32 %v38, %v49
    %51 = vset.pattern.permute.xlu0 2
    %52 = vperm.xlu0 %51, %v24
    %v53 = vpop.permute.xlu0 %52
    %vm54 = vcmp.eq.s32.totalorder %v53, %v23
    %v55 = vsel %vm54, 1, 0
    %v56 = vcvt.s32.f32 %v55
    %57 = vset.pattern.permute.xlu0 2
    %58 = vperm.xlu0 %57, %v25
    %v59 = vpop.permute.xlu0 %58
    %v61 = vmul.f32 %v56, %v59
    %v62 = vadd.f32 %v50, %v61
    %63 = vset.pattern.permute.xlu0 3
    %64 = vperm.xlu0 %63, %v24
    %v65 = vpop.permute.xlu0 %64
    %vm66 = vcmp.eq.s32.totalorder %v65, %v23
    %v67 = vsel %vm66, 1, 0
    %v68 = vcvt.s32.f32 %v67
    %69 = vset.pattern.permute.xlu0 3
    %70 = vperm.xlu0 %69, %v25
    %v71 = vpop.permute.xlu0 %70
    %v73 = vmul.f32 %v68, %v71
    %v74 = vadd.f32 %v62, %v73
    %75 = vset.pattern.permute.xlu0 4
    %76 = vperm.xlu0 %75, %v24
    %v77 = vpop.permute.xlu0 %76
    %vm78 = vcmp.eq.s32.totalorder %v77, %v23
    %v79 = vsel %vm78, 1, 0
    %v80 = vcvt.s32.f32 %v79
    %81 = vset.pattern.permute.xlu0 4
    %82 = vperm.xlu0 %81, %v25
    %v83 = vpop.permute.xlu0 %82
    %v85 = vmul.f32 %v80, %v83
    %v86 = vadd.f32 %v74, %v85
    %87 = vset.pattern.permute.xlu0 5
    %88 = vperm.xlu0 %87, %v24
    %v89 = vpop.permute.xlu0 %88
    %vm90 = vcmp.eq.s32.totalorder %v89, %v23
    %v91 = vsel %vm90, 1, 0
    %v92 = vcvt.s32.f32 %v91
    %93 = vset.pattern.permute.xlu0 5
    %94 = vperm.xlu0 %93, %v25
    %v95 = vpop.permute.xlu0 %94
    %v97 = vmul.f32 %v92, %v95
    %v98 = vadd.f32 %v86, %v97
    %99 = vset.pattern.permute.xlu0 6
    %100 = vperm.xlu0 %99, %v24
    %v101 = vpop.permute.xlu0 %100
    %vm102 = vcmp.eq.s32.totalorder %v101, %v23
    %v103 = vsel %vm102, 1, 0
    %v104 = vcvt.s32.f32 %v103
    %105 = vset.pattern.permute.xlu0 6
    %106 = vperm.xlu0 %105, %v25
    %v107 = vpop.permute.xlu0 %106
    %v109 = vmul.f32 %v104, %v107
    %v110 = vadd.f32 %v98, %v109
    %111 = vset.pattern.permute.xlu0 7
    %112 = vperm.xlu0 %111, %v24
    %v113 = vpop.permute.xlu0 %112
    %vm114 = vcmp.eq.s32.totalorder %v113, %v23
    %v115 = vsel %vm114, 1, 0
    %v116 = vcvt.s32.f32 %v115
    %117 = vset.pattern.permute.xlu0 7
    %118 = vperm.xlu0 %117, %v25
    %v119 = vpop.permute.xlu0 %118
    %v121 = vmul.f32 %v116, %v119
    %v122 = vadd.f32 %v110, %v121
    %v123 = vld [vmem:[%s3] sm:$0xff]
    %v124 = vld [vmem:[%s3 + $0x8] sm:$0xff]
    %v125 = vld [vmem:[%s3 + $0x10] sm:$0xff]
    %v126 = vld [vmem:[%s3 + $0x18] sm:$0xff]
    %v127 = vld [vmem:[%s3 + $0x20] sm:$0xff]
    %v128 = vld [vmem:[%s3 + $0x28] sm:$0xff]
    %v129 = vld [vmem:[%s3 + $0x30] sm:$0xff]
    %v130 = vld [vmem:[%s3 + $0x38] sm:$0xff]
    %vm131 = vcmask 523264
    %v133 = vsel %vm131, %v122, 0
    %135 = vmatprep.subr.mxu0 0.0
    %136 = vmatpush1.msra.mxu0 %v123
    %137 = vmatprep.subr.mxu0 0.0
    %138 = vmatpush1.msra.mxu0 %v124
    %139 = vmatprep.subr.mxu0 0.0
    %140 = vmatpush1.msra.mxu0 %v125
    %141 = vmatprep.subr.mxu0 0.0
    %142 = vmatpush1.msra.mxu0 %v126
    %143 = vmatprep.subr.mxu0 0.0
    %144 = vmatpush1.msra.mxu0 %v127
    %145 = vmatprep.subr.mxu0 0.0
    %146 = vmatpush1.msra.mxu0 %v128
    %147 = vmatprep.subr.mxu0 0.0
    %148 = vmatpush1.msra.mxu0 %v129
    %149 = vmatprep.subr.mxu0 0.0
    %150 = vmatpush1.msra.mxu0 %v130
    %151 = vmatprep.subr.mxu0 0.0
    %152 = vmatpush1.msra.mxu0 0.0
    %153 = vmatprep.subr.mxu0 0.0
    %154 = vmatpush1.msra.mxu0 0.0
    %155 = vmatprep.subr.mxu0 0.0
    %156 = vmatpush1.msra.mxu0 0.0
    %157 = vmatprep.subr.mxu0 0.0
    %158 = vmatpush1.msra.mxu0 0.0
    %159 = vmatprep.subr.mxu0 0.0
    %160 = vmatpush1.msra.mxu0 0.0
    %161 = vmatprep.subr.mxu0 0.0
    %162 = vmatpush1.msra.mxu0 0.0
    %163 = vmatprep.subr.mxu0 0.0
    %164 = vmatpush1.msra.mxu0 0.0
    %165 = vmatprep.subr.mxu0 0.0
    %166 = vmatpush1.msra.mxu0 0.0
    %167 = vmatprep.subr.mxu0 0.0
    %168 = vmatpush1.msra.mxu0 0.0
    %169 = vmatprep.subr.mxu0 0.0
    %170 = vmatpush1.msra.mxu0 0.0
    %171 = vmatprep.subr.mxu0 0.0
    %172 = vmatpush1.msra.mxu0 0.0
    %173 = vmatprep.subr.mxu0 0.0
    %174 = vmatpush1.msra.mxu0 0.0
    %175 = vmatprep.subr.mxu0 0.0
    %176 = vmatpush1.msra.mxu0 0.0
    %177 = vmatprep.subr.mxu0 0.0
    %178 = vmatpush1.msra.mxu0 0.0
    %179 = vmatprep.subr.mxu0 0.0
    %180 = vmatpush1.msra.mxu0 0.0
    %181 = vmatprep.subr.mxu0 0.0
    %182 = vmatpush1.msra.mxu0 0.0
    %183 = vmatprep.subr.mxu0 0.0
    %184 = vmatpush1.msra.mxu0 0.0
    %185 = vmatprep.subr.mxu0 0.0
    %186 = vmatpush1.msra.mxu0 0.0
    %187 = vmatprep.subr.mxu0 0.0
    %188 = vmatpush1.msra.mxu0 0.0
    %189 = vmatprep.subr.mxu0 0.0
    %190 = vmatpush1.msra.mxu0 0.0
    %191 = vmatprep.subr.mxu0 0.0
    %192 = vmatpush1.msra.mxu0 0.0
    %193 = vmatprep.subr.mxu0 0.0
    %194 = vmatpush1.msra.mxu0 0.0
    %195 = vmatprep.subr.mxu0 0.0
    %196 = vmatpush1.msra.mxu0 0.0
    %197 = vmatprep.subr.mxu0 0.0
    %198 = vmatpush1.msra.mxu0 0.0
    %199 = vmatprep.mubr.f32.mxu0 0.0
    %200 = vmatmul.mubr.f32.gmra.mrb[0].mxu0 %v133
    %v201 = vpop.f32.mrb[0].mxu0
    %v202 = vadd.f32 0.0, %v201
    %v203 = vpop.f32.mrb[0].mxu0
    %204 = vdwg.mxu0
    %vm205 = vcmask 64512
    %v206 = vsel %vm205, %v25, 0.0
    %207 = vadd.xlane.f32.xlu0 %v206
    %v208 = vpop.xlane.xlu0 %207
    %v209 = vmax.f32 %v208, 1.0
    %v210 = vrcp.pop %v209
    %v211 = vmul.f32 %v202, %v210
    %v212 = vld [vmem:[%s4] sm:$0xff]
    %v213 = vld [vmem:[%s4 + $0x8] sm:$0xff]
    %v214 = vld [vmem:[%s4 + $0x10] sm:$0xff]
    %v215 = vld [vmem:[%s4 + $0x18] sm:$0xff]
    %v216 = vld [vmem:[%s4 + $0x20] sm:$0x1]
    %v217 = vlaneseq
    %v218 = vshrl.u32 %v217, 7
    %v219 = vsub.s32 0, %v218
    %v220 = vrot.slane %v216, %v219
    %vm221 = vcmask 261120
    %v223 = vsel %vm221, %v211, 0
    %225 = vmatprep.subr.mxu0 0.0
    %226 = vmatpush1.msra.mxu0 %v212
    %227 = vmatprep.subr.mxu0 0.0
    %228 = vmatpush1.msra.mxu0 %v213
    %229 = vmatprep.subr.mxu0 0.0
    %230 = vmatpush1.msra.mxu0 %v214
    %231 = vmatprep.subr.mxu0 0.0
    %232 = vmatpush1.msra.mxu0 %v215
    %233 = vmatprep.subr.mxu0 0.0
    %234 = vmatpush1.msra.mxu0 0.0
    %235 = vmatprep.subr.mxu0 0.0
    %236 = vmatpush1.msra.mxu0 0.0
    %237 = vmatprep.subr.mxu0 0.0
    %238 = vmatpush1.msra.mxu0 0.0
    %239 = vmatprep.subr.mxu0 0.0
    %240 = vmatpush1.msra.mxu0 0.0
    %241 = vmatprep.subr.mxu0 0.0
    %242 = vmatpush1.msra.mxu0 0.0
    %243 = vmatprep.subr.mxu0 0.0
    %244 = vmatpush1.msra.mxu0 0.0
    %245 = vmatprep.subr.mxu0 0.0
    %246 = vmatpush1.msra.mxu0 0.0
    %247 = vmatprep.subr.mxu0 0.0
    %248 = vmatpush1.msra.mxu0 0.0
    %249 = vmatprep.subr.mxu0 0.0
    %250 = vmatpush1.msra.mxu0 0.0
    %251 = vmatprep.subr.mxu0 0.0
    %252 = vmatpush1.msra.mxu0 0.0
    %253 = vmatprep.subr.mxu0 0.0
    %254 = vmatpush1.msra.mxu0 0.0
    %255 = vmatprep.subr.mxu0 0.0
    %256 = vmatpush1.msra.mxu0 0.0
    %257 = vmatprep.subr.mxu0 0.0
    %258 = vmatpush1.msra.mxu0 0.0
    %259 = vmatprep.subr.mxu0 0.0
    %260 = vmatpush1.msra.mxu0 0.0
    %261 = vmatprep.subr.mxu0 0.0
    %262 = vmatpush1.msra.mxu0 0.0
    %263 = vmatprep.subr.mxu0 0.0
    %264 = vmatpush1.msra.mxu0 0.0
    %265 = vmatprep.subr.mxu0 0.0
    %266 = vmatpush1.msra.mxu0 0.0
    %267 = vmatprep.subr.mxu0 0.0
    %268 = vmatpush1.msra.mxu0 0.0
    %269 = vmatprep.subr.mxu0 0.0
    %270 = vmatpush1.msra.mxu0 0.0
    %271 = vmatprep.subr.mxu0 0.0
    %272 = vmatpush1.msra.mxu0 0.0
    %273 = vmatprep.subr.mxu0 0.0
    %274 = vmatpush1.msra.mxu0 0.0
    %275 = vmatprep.subr.mxu0 0.0
    %276 = vmatpush1.msra.mxu0 0.0
    %277 = vmatprep.subr.mxu0 0.0
    %278 = vmatpush1.msra.mxu0 0.0
    %279 = vmatprep.subr.mxu0 0.0
    %280 = vmatpush1.msra.mxu0 0.0
    %281 = vmatprep.subr.mxu0 0.0
    %282 = vmatpush1.msra.mxu0 0.0
    %283 = vmatprep.subr.mxu0 0.0
    %284 = vmatpush1.msra.mxu0 0.0
    %285 = vmatprep.subr.mxu0 0.0
    %286 = vmatpush1.msra.mxu0 0.0
    %287 = vmatprep.subr.mxu0 0.0
    %288 = vmatpush1.msra.mxu0 0.0
    %289 = vmatprep.mubr.f32.mxu0 0.0
    %290 = vmatmul.mubr.f32.gmra.mrb[0].mxu0 %v223
    %v291 = vpop.f32.mrb[0].mxu0
    %v292 = vadd.f32 %v220, %v291
    %v293 = vpop.f32.mrb[0].mxu0
    %294 = vdwg.mxu0
    %v295 = vmul.f32 %v292, %v292
    %vm296 = vcmask 130048
    %v297 = vsel %vm296, %v295, 0.0
    %298 = vadd.xlane.f32.xlu0 %v297
    %v299 = vpop.xlane.xlu0 %298
    %v300 = vmax.f32 %v299, 1e-24
    %v301 = vrsqrt.pop %v300
    %v302 = vmul.f32 %v292, %v301
    %s303 = scalar_lea.vmem %s1, 8
    %v304 = vld [vmem:[%s303] sm:$0xff]
    %s305 = scalar_lea.vmem %s2, 8
    %v306 = vld [vmem:[%s305] sm:$0xff]
    %307 = vset.pattern.permute.xlu0 0
    %308 = vperm.xlu0 %307, %v304
    %v309 = vpop.permute.xlu0 %308
    %vm310 = vcmp.eq.s32.totalorder %v309, %v23
    %v311 = vsel %vm310, 1, 0
    %v312 = vcvt.s32.f32 %v311
    %314 = vset.pattern.permute.xlu0 0
    %315 = vperm.xlu0 %314, %v306
    %v316 = vpop.permute.xlu0 %315
    %v318 = vmul.f32 %v312, %v316
    %v319 = vadd.f32 %v318, 0.0
    %320 = vset.pattern.permute.xlu0 1
    %321 = vperm.xlu0 %320, %v304
    %v322 = vpop.permute.xlu0 %321
    %vm323 = vcmp.eq.s32.totalorder %v322, %v23
    %v324 = vsel %vm323, 1, 0
    %v325 = vcvt.s32.f32 %v324
    %326 = vset.pattern.permute.xlu0 1
    %327 = vperm.xlu0 %326, %v306
    %v328 = vpop.permute.xlu0 %327
    %v330 = vmul.f32 %v325, %v328
    %v331 = vadd.f32 %v319, %v330
    %332 = vset.pattern.permute.xlu0 2
    %333 = vperm.xlu0 %332, %v304
    %v334 = vpop.permute.xlu0 %333
    %vm335 = vcmp.eq.s32.totalorder %v334, %v23
    %v336 = vsel %vm335, 1, 0
    %v337 = vcvt.s32.f32 %v336
    %338 = vset.pattern.permute.xlu0 2
    %339 = vperm.xlu0 %338, %v306
    %v340 = vpop.permute.xlu0 %339
    %v342 = vmul.f32 %v337, %v340
    %v343 = vadd.f32 %v331, %v342
    %344 = vset.pattern.permute.xlu0 3
    %345 = vperm.xlu0 %344, %v304
    %v346 = vpop.permute.xlu0 %345
    %vm347 = vcmp.eq.s32.totalorder %v346, %v23
    %v348 = vsel %vm347, 1, 0
    %v349 = vcvt.s32.f32 %v348
    %350 = vset.pattern.permute.xlu0 3
    %351 = vperm.xlu0 %350, %v306
    %v352 = vpop.permute.xlu0 %351
    %v354 = vmul.f32 %v349, %v352
    %v355 = vadd.f32 %v343, %v354
    %356 = vset.pattern.permute.xlu0 4
    %357 = vperm.xlu0 %356, %v304
    %v358 = vpop.permute.xlu0 %357
    %vm359 = vcmp.eq.s32.totalorder %v358, %v23
    %v360 = vsel %vm359, 1, 0
    %v361 = vcvt.s32.f32 %v360
    %362 = vset.pattern.permute.xlu0 4
    %363 = vperm.xlu0 %362, %v306
    %v364 = vpop.permute.xlu0 %363
    %v366 = vmul.f32 %v361, %v364
    %v367 = vadd.f32 %v355, %v366
    %368 = vset.pattern.permute.xlu0 5
    %369 = vperm.xlu0 %368, %v304
    %v370 = vpop.permute.xlu0 %369
    %vm371 = vcmp.eq.s32.totalorder %v370, %v23
    %v372 = vsel %vm371, 1, 0
    %v373 = vcvt.s32.f32 %v372
    %374 = vset.pattern.permute.xlu0 5
    %375 = vperm.xlu0 %374, %v306
    %v376 = vpop.permute.xlu0 %375
    %v378 = vmul.f32 %v373, %v376
    %v379 = vadd.f32 %v367, %v378
    %380 = vset.pattern.permute.xlu0 6
    %381 = vperm.xlu0 %380, %v304
    %v382 = vpop.permute.xlu0 %381
    %vm383 = vcmp.eq.s32.totalorder %v382, %v23
    %v384 = vsel %vm383, 1, 0
    %v385 = vcvt.s32.f32 %v384
    %386 = vset.pattern.permute.xlu0 6
    %387 = vperm.xlu0 %386, %v306
    %v388 = vpop.permute.xlu0 %387
    %v390 = vmul.f32 %v385, %v388
    %v391 = vadd.f32 %v379, %v390
    %392 = vset.pattern.permute.xlu0 7
    %393 = vperm.xlu0 %392, %v304
    %v394 = vpop.permute.xlu0 %393
    %vm395 = vcmp.eq.s32.totalorder %v394, %v23
    %v396 = vsel %vm395, 1, 0
    %v397 = vcvt.s32.f32 %v396
    %398 = vset.pattern.permute.xlu0 7
    %399 = vperm.xlu0 %398, %v306
    %v400 = vpop.permute.xlu0 %399
    %v402 = vmul.f32 %v397, %v400
    %v403 = vadd.f32 %v391, %v402
    %s404 = scalar_lea.vmem %s3, 64
    %v405 = vld [vmem:[%s404] sm:$0xff]
    %v406 = vld [vmem:[%s404 + $0x8] sm:$0xff]
    %v407 = vld [vmem:[%s404 + $0x10] sm:$0xff]
    %v408 = vld [vmem:[%s404 + $0x18] sm:$0xff]
    %v409 = vld [vmem:[%s404 + $0x20] sm:$0xff]
    %v410 = vld [vmem:[%s404 + $0x28] sm:$0xff]
    %v411 = vld [vmem:[%s404 + $0x30] sm:$0xff]
    %v412 = vld [vmem:[%s404 + $0x38] sm:$0xff]
    %v414 = vsel %vm131, %v403, 0
    %416 = vmatprep.subr.mxu0 0.0
    %417 = vmatpush1.msra.mxu0 %v405
    %418 = vmatprep.subr.mxu0 0.0
    %419 = vmatpush1.msra.mxu0 %v406
    %420 = vmatprep.subr.mxu0 0.0
    %421 = vmatpush1.msra.mxu0 %v407
    %422 = vmatprep.subr.mxu0 0.0
    %423 = vmatpush1.msra.mxu0 %v408
    %424 = vmatprep.subr.mxu0 0.0
    %425 = vmatpush1.msra.mxu0 %v409
    %426 = vmatprep.subr.mxu0 0.0
    %427 = vmatpush1.msra.mxu0 %v410
    %428 = vmatprep.subr.mxu0 0.0
    %429 = vmatpush1.msra.mxu0 %v411
    %430 = vmatprep.subr.mxu0 0.0
    %431 = vmatpush1.msra.mxu0 %v412
    %432 = vmatprep.subr.mxu0 0.0
    %433 = vmatpush1.msra.mxu0 0.0
    %434 = vmatprep.subr.mxu0 0.0
    %435 = vmatpush1.msra.mxu0 0.0
    %436 = vmatprep.subr.mxu0 0.0
    %437 = vmatpush1.msra.mxu0 0.0
    %438 = vmatprep.subr.mxu0 0.0
    %439 = vmatpush1.msra.mxu0 0.0
    %440 = vmatprep.subr.mxu0 0.0
    %441 = vmatpush1.msra.mxu0 0.0
    %442 = vmatprep.subr.mxu0 0.0
    %443 = vmatpush1.msra.mxu0 0.0
    %444 = vmatprep.subr.mxu0 0.0
    %445 = vmatpush1.msra.mxu0 0.0
    %446 = vmatprep.subr.mxu0 0.0
    %447 = vmatpush1.msra.mxu0 0.0
    %448 = vmatprep.subr.mxu0 0.0
    %449 = vmatpush1.msra.mxu0 0.0
    %450 = vmatprep.subr.mxu0 0.0
    %451 = vmatpush1.msra.mxu0 0.0
    %452 = vmatprep.subr.mxu0 0.0
    %453 = vmatpush1.msra.mxu0 0.0
    %454 = vmatprep.subr.mxu0 0.0
    %455 = vmatpush1.msra.mxu0 0.0
    %456 = vmatprep.subr.mxu0 0.0
    %457 = vmatpush1.msra.mxu0 0.0
    %458 = vmatprep.subr.mxu0 0.0
    %459 = vmatpush1.msra.mxu0 0.0
    %460 = vmatprep.subr.mxu0 0.0
    %461 = vmatpush1.msra.mxu0 0.0
    %462 = vmatprep.subr.mxu0 0.0
    %463 = vmatpush1.msra.mxu0 0.0
    %464 = vmatprep.subr.mxu0 0.0
    %465 = vmatpush1.msra.mxu0 0.0
    %466 = vmatprep.subr.mxu0 0.0
    %467 = vmatpush1.msra.mxu0 0.0
    %468 = vmatprep.subr.mxu0 0.0
    %469 = vmatpush1.msra.mxu0 0.0
    %470 = vmatprep.subr.mxu0 0.0
    %471 = vmatpush1.msra.mxu0 0.0
    %472 = vmatprep.subr.mxu0 0.0
    %473 = vmatpush1.msra.mxu0 0.0
    %474 = vmatprep.subr.mxu0 0.0
    %475 = vmatpush1.msra.mxu0 0.0
    %476 = vmatprep.subr.mxu0 0.0
    %477 = vmatpush1.msra.mxu0 0.0
    %478 = vmatprep.subr.mxu0 0.0
    %479 = vmatpush1.msra.mxu0 0.0
    %480 = vmatprep.mubr.f32.mxu0 0.0
    %481 = vmatmul.mubr.f32.gmra.mrb[0].mxu0 %v414
    %v482 = vpop.f32.mrb[0].mxu0
    %v483 = vadd.f32 0.0, %v482
    %v484 = vpop.f32.mrb[0].mxu0
    %485 = vdwg.mxu0
    %v486 = vsel %vm205, %v306, 0.0
    %487 = vadd.xlane.f32.xlu0 %v486
    %v488 = vpop.xlane.xlu0 %487
    %v489 = vmax.f32 %v488, 1.0
    %v490 = vrcp.pop %v489
    %v491 = vmul.f32 %v483, %v490
    %s492 = scalar_lea.vmem %s4, 40
    %v493 = vld [vmem:[%s492] sm:$0xff]
    %v494 = vld [vmem:[%s492 + $0x8] sm:$0xff]
    %v495 = vld [vmem:[%s492 + $0x10] sm:$0xff]
    %v496 = vld [vmem:[%s492 + $0x18] sm:$0xff]
    %v497 = vld [vmem:[%s492 + $0x20] sm:$0x1]
    %v498 = vlaneseq
    %v499 = vshrl.u32 %v498, 7
    %v500 = vsub.s32 0, %v499
    %v501 = vrot.slane %v497, %v500
    %v503 = vsel %vm221, %v491, 0
    %505 = vmatprep.subr.mxu0 0.0
    %506 = vmatpush1.msra.mxu0 %v493
    %507 = vmatprep.subr.mxu0 0.0
    %508 = vmatpush1.msra.mxu0 %v494
    %509 = vmatprep.subr.mxu0 0.0
    %510 = vmatpush1.msra.mxu0 %v495
    %511 = vmatprep.subr.mxu0 0.0
    %512 = vmatpush1.msra.mxu0 %v496
    %513 = vmatprep.subr.mxu0 0.0
    %514 = vmatpush1.msra.mxu0 0.0
    %515 = vmatprep.subr.mxu0 0.0
    %516 = vmatpush1.msra.mxu0 0.0
    %517 = vmatprep.subr.mxu0 0.0
    %518 = vmatpush1.msra.mxu0 0.0
    %519 = vmatprep.subr.mxu0 0.0
    %520 = vmatpush1.msra.mxu0 0.0
    %521 = vmatprep.subr.mxu0 0.0
    %522 = vmatpush1.msra.mxu0 0.0
    %523 = vmatprep.subr.mxu0 0.0
    %524 = vmatpush1.msra.mxu0 0.0
    %525 = vmatprep.subr.mxu0 0.0
    %526 = vmatpush1.msra.mxu0 0.0
    %527 = vmatprep.subr.mxu0 0.0
    %528 = vmatpush1.msra.mxu0 0.0
    %529 = vmatprep.subr.mxu0 0.0
    %530 = vmatpush1.msra.mxu0 0.0
    %531 = vmatprep.subr.mxu0 0.0
    %532 = vmatpush1.msra.mxu0 0.0
    %533 = vmatprep.subr.mxu0 0.0
    %534 = vmatpush1.msra.mxu0 0.0
    %535 = vmatprep.subr.mxu0 0.0
    %536 = vmatpush1.msra.mxu0 0.0
    %537 = vmatprep.subr.mxu0 0.0
    %538 = vmatpush1.msra.mxu0 0.0
    %539 = vmatprep.subr.mxu0 0.0
    %540 = vmatpush1.msra.mxu0 0.0
    %541 = vmatprep.subr.mxu0 0.0
    %542 = vmatpush1.msra.mxu0 0.0
    %543 = vmatprep.subr.mxu0 0.0
    %544 = vmatpush1.msra.mxu0 0.0
    %545 = vmatprep.subr.mxu0 0.0
    %546 = vmatpush1.msra.mxu0 0.0
    %547 = vmatprep.subr.mxu0 0.0
    %548 = vmatpush1.msra.mxu0 0.0
    %549 = vmatprep.subr.mxu0 0.0
    %550 = vmatpush1.msra.mxu0 0.0
    %551 = vmatprep.subr.mxu0 0.0
    %552 = vmatpush1.msra.mxu0 0.0
    %553 = vmatprep.subr.mxu0 0.0
    %554 = vmatpush1.msra.mxu0 0.0
    %555 = vmatprep.subr.mxu0 0.0
    %556 = vmatpush1.msra.mxu0 0.0
    %557 = vmatprep.subr.mxu0 0.0
    %558 = vmatpush1.msra.mxu0 0.0
    %559 = vmatprep.subr.mxu0 0.0
    %560 = vmatpush1.msra.mxu0 0.0
    %561 = vmatprep.subr.mxu0 0.0
    %562 = vmatpush1.msra.mxu0 0.0
    %563 = vmatprep.subr.mxu0 0.0
    %564 = vmatpush1.msra.mxu0 0.0
    %565 = vmatprep.subr.mxu0 0.0
    %566 = vmatpush1.msra.mxu0 0.0
    %567 = vmatprep.subr.mxu0 0.0
    %568 = vmatpush1.msra.mxu0 0.0
    %569 = vmatprep.mubr.f32.mxu0 0.0
    %570 = vmatmul.mubr.f32.gmra.mrb[0].mxu0 %v503
    %v571 = vpop.f32.mrb[0].mxu0
    %v572 = vadd.f32 %v501, %v571
    %v573 = vpop.f32.mrb[0].mxu0
    %574 = vdwg.mxu0
    %v575 = vmul.f32 %v572, %v572
    %v576 = vsel %vm296, %v575, 0.0
    %577 = vadd.xlane.f32.xlu0 %v576
    %v578 = vpop.xlane.xlu0 %577
    %v579 = vmax.f32 %v578, 1e-24
    %v580 = vrsqrt.pop %v579
    %v581 = vmul.f32 %v572, %v580
    %v583 = vsel %vm296, %v302, 0
    %v586 = vsel %vm296, %v581, 0
    %588 = vmatprep.subr.mxu0 0.0
    %589 = vmatpush1.xpose.msra.mxu0 %v586
    %590 = vmatprep.subr.mxu0 0.0
    %591 = vmatpush1.xpose.msra.mxu0 0.0
    %592 = vmatprep.subr.mxu0 0.0
    %593 = vmatpush1.xpose.msra.mxu0 0.0
    %594 = vmatprep.subr.mxu0 0.0
    %595 = vmatpush1.xpose.msra.mxu0 0.0
    %596 = vmatprep.subr.mxu0 0.0
    %597 = vmatpush1.xpose.msra.mxu0 0.0
    %598 = vmatprep.subr.mxu0 0.0
    %599 = vmatpush1.xpose.msra.mxu0 0.0
    %600 = vmatprep.subr.mxu0 0.0
    %601 = vmatpush1.xpose.msra.mxu0 0.0
    %602 = vmatprep.subr.mxu0 0.0
    %603 = vmatpush1.xpose.msra.mxu0 0.0
    %604 = vmatprep.subr.mxu0 0.0
    %605 = vmatpush1.xpose.msra.mxu0 0.0
    %606 = vmatprep.subr.mxu0 0.0
    %607 = vmatpush1.xpose.msra.mxu0 0.0
    %608 = vmatprep.subr.mxu0 0.0
    %609 = vmatpush1.xpose.msra.mxu0 0.0
    %610 = vmatprep.subr.mxu0 0.0
    %611 = vmatpush1.xpose.msra.mxu0 0.0
    %612 = vmatprep.subr.mxu0 0.0
    %613 = vmatpush1.xpose.msra.mxu0 0.0
    %614 = vmatprep.subr.mxu0 0.0
    %615 = vmatpush1.xpose.msra.mxu0 0.0
    %616 = vmatprep.subr.mxu0 0.0
    %617 = vmatpush1.xpose.msra.mxu0 0.0
    %618 = vmatprep.subr.mxu0 0.0
    %619 = vmatpush1.xpose.msra.mxu0 0.0
    %620 = vmatprep.subr.mxu0 0.0
    %621 = vmatpush1.xpose.msra.mxu0 0.0
    %622 = vmatprep.subr.mxu0 0.0
    %623 = vmatpush1.xpose.msra.mxu0 0.0
    %624 = vmatprep.subr.mxu0 0.0
    %625 = vmatpush1.xpose.msra.mxu0 0.0
    %626 = vmatprep.subr.mxu0 0.0
    %627 = vmatpush1.xpose.msra.mxu0 0.0
    %628 = vmatprep.subr.mxu0 0.0
    %629 = vmatpush1.xpose.msra.mxu0 0.0
    %630 = vmatprep.subr.mxu0 0.0
    %631 = vmatpush1.xpose.msra.mxu0 0.0
    %632 = vmatprep.subr.mxu0 0.0
    %633 = vmatpush1.xpose.msra.mxu0 0.0
    %634 = vmatprep.subr.mxu0 0.0
    %635 = vmatpush1.xpose.msra.mxu0 0.0
    %636 = vmatprep.subr.mxu0 0.0
    %637 = vmatpush1.xpose.msra.mxu0 0.0
    %638 = vmatprep.subr.mxu0 0.0
    %639 = vmatpush1.xpose.msra.mxu0 0.0
    %640 = vmatprep.subr.mxu0 0.0
    %641 = vmatpush1.xpose.msra.mxu0 0.0
    %642 = vmatprep.subr.mxu0 0.0
    %643 = vmatpush1.xpose.msra.mxu0 0.0
    %644 = vmatprep.subr.mxu0 0.0
    %645 = vmatpush1.xpose.msra.mxu0 0.0
    %646 = vmatprep.subr.mxu0 0.0
    %647 = vmatpush1.xpose.msra.mxu0 0.0
    %648 = vmatprep.subr.mxu0 0.0
    %649 = vmatpush1.xpose.msra.mxu0 0.0
    %650 = vmatprep.subr.mxu0 0.0
    %651 = vmatpush1.xpose.msra.mxu0 0.0
    %652 = vmatprep.mubr.f32.mxu0 0.0
    %653 = vmatmul.mubr.f32.gmra.mrb[0].mxu0 %v583
    %v654 = vpop.f32.mrb[0].mxu0
    %v655 = vadd.f32 0.0, %v654
    %v656 = vpop.f32.mrb[0].mxu0
    %657 = vdwg.mxu0
    %s658 = sld [smem:[#allocation2]]
    %v659 = vstv %s658
    %v660 = vmul.f32 %v655, %v659
    %661 = vst.msk [vmem:[#allocation3] sm:$0xff] %vm205, %v660
    // Predicated region
    $region22: #{contrastive_forward.1} parent=1 // pred_check
      _
    $region23: #{contrastive_forward.1} parent=1 // pred_check_branch
      %663 = sbr.rel (0) target = $region25
    $region24: #{contrastive_forward.1} parent=1 // pred_region
      %s665 = ssub.s32 128, 128
      %666 = vsyncadd [#allocation4], %s665
      %s668 = sshll.u32 [#allocation3], 4
      %s669 = int_to_ptr.vmem [resolvable:$true] %s668
      %671 = dma.vmem_to_hbm [thread:$0]  %s669, 128, %s5, [#allocation4]
    $region25: #{contrastive_forward.1} parent=1 // pred_fallthru
      _
    // Predicated region
    $region26: #{contrastive_forward.1} parent=1 // pred_check
      _
    $region27: #{contrastive_forward.1} parent=1 // pred_check_branch
      %673 = sbr.rel (0) target = $region29
    $region28: #{contrastive_forward.1} parent=1 // pred_region
      %674 = dma.done [#allocation4], 128
    $region29: #{contrastive_forward.1} parent=1 // pred_fallthru
      _
    %675 = vsyncpa [#allocation4], 1

</llo_original>
